<compile_context>
chip_gen: v6e
topology: v6e:2x2x1
jax: 0.10.0
libtpu: 0.0.40
codegen_flags: <defaults>
</compile_context>

<pallas_src>
import math

import jax
import jax.numpy as jnp
from jax.experimental import pallas as pl
from jax.experimental.pallas import tpu as pltpu

_LANE = 128                      # vreg lane width
_TILE_BUDGET_BYTES = 24 << 20    # x tile + out tile, each double-buffered (4 bufs)
_MAX_TN_BYTES = 8 << 10          # cap on lane-tile width (bytes per row)


def _layerscale_kernel(x_ref, g_ref, o_ref):
    # x_ref: (tm, tn) tile, g_ref: (1, tn) gamma row, o_ref: (tm, tn) tile.
    o_ref[...] = x_ref[...] * g_ref[...]


def _cdiv(a: int, b: int) -> int:
    return -(-a // b)


def _round_up(a: int, b: int) -> int:
    return _cdiv(a, b) * b


def layer_scale(x: jax.Array, gamma: jax.Array) -> jax.Array:
    """y = x * gamma with gamma (D,) broadcast over the last dim of x (..., D)."""
    orig_shape = x.shape
    D = orig_shape[-1]
    assert gamma.shape == (D,), f"gamma must be ({D},), got {gamma.shape}"

    dtype = x.dtype
    itemsize = jnp.dtype(dtype).itemsize
    sublane = max(8, 32 // itemsize)           # 8 f32, 16 bf16, 32 int8/fp8

    # Cast gamma to the activation dtype to avoid in-kernel promotion.
    gamma = gamma.astype(dtype)

    # Flatten leading dims to rows.
    x2d = x.reshape(-1, D)
    M = x2d.shape[0]

    # Lane-density fold: pack k rows into the lane axis -> last dim multiple of 128.
    k = _LANE // math.gcd(D, _LANE)
    D_eff = k * D                              # = lcm(D, 128), multiple of 128
    m_fold = _cdiv(M, k)                       # folded rows needed

    # Lane tile tn: largest 128-multiple divisor of D_eff under the byte cap.
    max_d = max(1, (_MAX_TN_BYTES // itemsize) // _LANE)
    q = D_eff // _LANE
    d = 1
    for cand in range(min(q, max_d), 0, -1):
        if q % cand == 0:
            d = cand
            break
    tn = _LANE * d

    # Row tile tm from the VMEM budget (in + out tiles, each double-buffered).
    tm = _TILE_BUDGET_BYTES // (4 * tn * itemsize)
    tm = max((tm // sublane) * sublane, sublane)
    tm = min(tm, _round_up(m_fold, sublane))

    # Pad rows so the folded slab is an exact multiple of (tm rows) x (k fold).
    m_fold_pad = max(_round_up(m_fold, tm), tm)
    M_pad = m_fold_pad * k
    if M_pad != M:
        x2d = jnp.pad(x2d, ((0, M_pad - M), (0, 0)))
    x_fold = x2d.reshape(m_fold_pad, D_eff)          # free reshape (contiguous)
    g_fold = jnp.tile(gamma, k).reshape(1, D_eff)    # gamma repeated across the fold

    grid = (m_fold_pad // tm, D_eff // tn)

    # Scoped VMEM: double-buffered x + out tiles, resident gamma, plus headroom.
    footprint = (4 * tm * tn + 2 * tn) * itemsize
    vmem_limit = int(min(footprint + (8 << 20), 48 << 20))

    out = pl.pallas_call(
        _layerscale_kernel,
        out_shape=jax.ShapeDtypeStruct((m_fold_pad, D_eff), dtype),
        grid=grid,
        in_specs=[
            pl.BlockSpec((tm, tn), lambda i, j: (i, j)),   # x tile
            pl.BlockSpec((1, tn), lambda i, j: (0, j)),    # gamma row (resident)
        ],
        out_specs=pl.BlockSpec((tm, tn), lambda i, j: (i, j)),
        compiler_params=pltpu.CompilerParams(
            dimension_semantics=("parallel", "parallel"),
            vmem_limit_bytes=vmem_limit,
        ),
    )(x_fold, g_fold)

    out = out.reshape(M_pad, D)[:M]
    return out.reshape(orig_shape)


if __name__ == "__main__":
    # Deterministic init, matching nn.Parameter(init_values * torch.ones(dim)).
    B, N, D = 2, 8, 32
    init_values = 1e-05
    gamma = init_values * jnp.ones((D,), dtype=jnp.float32)

    key = jax.random.PRNGKey(0)
    x = jax.random.normal(key, (B, N, D), dtype=jnp.float32)

    y = jax.block_until_ready(layer_scale(x, gamma))
    y_ref = x * gamma
    assert y.shape == x.shape and y.dtype == x.dtype
    assert jnp.allclose(y, y_ref, rtol=1e-6, atol=1e-6)

    # Exercise the padding + lane-folding path with an awkward (non-divisible) shape.
    B2, N2, D2 = 2, 7, 48
    gamma2 = init_values * jnp.ones((D2,), dtype=jnp.float32)
    x2 = jax.random.normal(jax.random.PRNGKey(0), (B2, N2, D2), dtype=jnp.float32)
    y2 = jax.block_until_ready(layer_scale(x2, gamma2))
    assert jnp.allclose(y2, x2 * gamma2, rtol=1e-6, atol=1e-6)

    print("KERNEL_OK")
</pallas_src>

<mosaic_0001>
module attributes {stable_mosaic.version = 11 : i64} {
  func.func @_layerscale_kernel(%arg0: i32, %arg1: i32, %arg2: memref<8x128xf32, #tpu.memory_space<vmem>>, %arg3: memref<1x128xf32, #tpu.memory_space<vmem>>, %arg4: memref<8x128xf32, #tpu.memory_space<vmem>>) attributes {dimension_semantics = [#tpu.dimension_semantics<parallel>, #tpu.dimension_semantics<parallel>], iteration_bounds = array<i64: 1, 1>, scalar_prefetch = 0 : i64, scratch_operands = 0 : i64, tpu.core_type = #tpu.core_type<tc>, window_params = [{transform_indices = @transform_0, window_bounds = array<i64: 8, 128>}, {transform_indices = @transform_1, window_bounds = array<i64: 1, 128>}, {transform_indices = @transform_2, window_bounds = array<i64: 8, 128>}]} {
    %c0 = arith.constant 0 : index
    %c0_0 = arith.constant 0 : index
    %0 = vector.load %arg2[%c0, %c0_0] : memref<8x128xf32, #tpu.memory_space<vmem>>, vector<8x128xf32>
    %c0_1 = arith.constant 0 : index
    %c0_2 = arith.constant 0 : index
    %1 = vector.load %arg3[%c0_1, %c0_2] : memref<1x128xf32, #tpu.memory_space<vmem>>, vector<1x128xf32>
    %2 = vector.broadcast %1 : vector<1x128xf32> to vector<8x128xf32>
    %3 = arith.mulf %0, %2 : vector<8x128xf32>
    %c0_3 = arith.constant 0 : index
    %c0_4 = arith.constant 0 : index
    %4 = vector.load %arg4[%c0_3, %c0_4] : memref<8x128xf32, #tpu.memory_space<vmem>>, vector<8x128xf32>
    tpu.vector_store %arg4[%c0_3, %c0_4], %3 {strides = array<i32>} : memref<8x128xf32, #tpu.memory_space<vmem>>, vector<8x128xf32>,
    return
  }
  func.func @transform_0(%arg0: i32, %arg1: i32) -> (i32, i32) {
    %c0_i32 = arith.constant 0 : i32
    return %arg0, %arg1 : i32, i32
  }
  func.func @transform_1(%arg0: i32, %arg1: i32) -> (i32, i32) {
    %c0_i32 = arith.constant 0 : i32
    %c0_i32_0 = arith.constant 0 : i32
    return %c0_i32, %arg1 : i32, i32
  }
  func.func @transform_2(%arg0: i32, %arg1: i32) -> (i32, i32) {
    %c0_i32 = arith.constant 0 : i32
    return %arg0, %arg1 : i32, i32
  }
}

</mosaic_0001>

<llo_original>
// kernel: tpu_custom_call.1
$region0: #{tpu_custom_call.1}
  #allocation0 [shape = 'u32[]', space=smem, size = 0x4, offset = 0x4, fixed_abs, tag = 'smem constant byte address 0x4 - core index']
  #allocation1 [shape = 'u32[144,128]{1,0:T(1,128)}', space=vmem, size = 0x12000, scoped, tag = 'internal scratch']
  %s0 = inlined_call_operand.hbm [shape: f32[8,128], index: 0, kind: input, shape index: {}]
  %s1 = inlined_call_operand.vmem [shape: f32[1,128], index: 1, kind: input, shape index: {}]
  %s2 = inlined_call_operand.hbm [shape: f32[8,128], index: 2, kind: output, shape index: {}]
  %s3 = sld [smem:[#allocation0]]
  $region22: #{tpu_custom_call.1} parent=0
    _
  %s5 = ssub.s32 1, %s3
  %s6 = scalar_select 0, %s5, %s3
  $region1: #{tpu_custom_call.1} parent=0
    #allocation2 [shape = 'u8[4096]{0}', space=vmem, size = 0x1000, scoped, tag = 'input window, operand 0, single buffered']
    #allocation3 [shape = 's32[1]{0}', space=sflag, size = 0x4, scoped, tag = 'scoped memory for tpu_custom_call.1']
    #allocation4 [shape = 's32[1]{0}', space=sflag, size = 0x4, scoped, tag = 'scoped memory for tpu_custom_call.1']
    #allocation5 [shape = 'u8[4096]{0}', space=vmem, size = 0x1000, scoped, tag = 'output window, operand 0, single buffered']
    %7 = vsyncpa [#allocation3], 0
    %8 = vsyncpa [#allocation4], 0
    // Predicated region
    $region2: #{tpu_custom_call.1} parent=1 // pred_check
      _
    $region3: #{tpu_custom_call.1} parent=1 // pred_check_branch
      %10 = sbr.rel (0) target = $region5
    $region4: #{tpu_custom_call.1} parent=1 // pred_region
      %s12 = ssub.s32 128, 128
      %13 = vsyncadd [#allocation3], %s12
      %s15 = sshll.u32 [#allocation2], 4
      %s16 = int_to_ptr.vmem [resolvable:$true] %s15
      %18 = dma.hbm_to_vmem [thread:$0]  %s0, 128, %s16, [#allocation3]
    $region5: #{tpu_custom_call.1} parent=1 // pred_fallthru
      _
    // Predicated region
    $region6: #{tpu_custom_call.1} parent=1 // pred_check
      _
    $region7: #{tpu_custom_call.1} parent=1 // pred_check_branch
      %20 = sbr.rel (0) target = $region9
    $region8: #{tpu_custom_call.1} parent=1 // pred_region
      _
    $region9: #{tpu_custom_call.1} parent=1 // pred_fallthru
      _
    // Predicated region
    $region10: #{tpu_custom_call.1} parent=1 // pred_check
      _
    $region11: #{tpu_custom_call.1} parent=1 // pred_check_branch
      %22 = sbr.rel (0) target = $region13
    $region12: #{tpu_custom_call.1} parent=1 // pred_region
      %23 = dma.done [#allocation3], 128
    $region13: #{tpu_custom_call.1} parent=1 // pred_fallthru
      _
    %v24 = vld [vmem:[#allocation2] sm:$0xff]
    %v25 = vld [vmem:[%s1] sm:$0x1]
    %v27 = vlaneseq
    %v28 = vshrl.u32 %v27, 7
    %v29 = vsub.s32 0, %v28
    %v30 = vrot.slane %v25, %v29
    %v32 = vmul.f32 %v24, %v30
    %33 = vst [vmem:[#allocation5] sm:$0xff] %v32
    // Predicated region
    $region14: #{tpu_custom_call.1} parent=1 // pred_check
      _
    $region15: #{tpu_custom_call.1} parent=1 // pred_check_branch
      %35 = sbr.rel (0) target = $region17
    $region16: #{tpu_custom_call.1} parent=1 // pred_region
      %s37 = ssub.s32 128, 128
      %38 = vsyncadd [#allocation4], %s37
      %s40 = sshll.u32 [#allocation5], 4
      %s41 = int_to_ptr.vmem [resolvable:$true] %s40
      %43 = dma.vmem_to_hbm [thread:$0]  %s41, 128, %s2, [#allocation4]
    $region17: #{tpu_custom_call.1} parent=1 // pred_fallthru
      _
    // Predicated region
    $region18: #{tpu_custom_call.1} parent=1 // pred_check
      _
    $region19: #{tpu_custom_call.1} parent=1 // pred_check_branch
      %45 = sbr.rel (0) target = $region21
    $region20: #{tpu_custom_call.1} parent=1 // pred_region
      %46 = dma.done [#allocation4], 128
    $region21: #{tpu_custom_call.1} parent=1 // pred_fallthru
      _
    %47 = vsyncpa [#allocation3], 1
    %48 = vsyncpa [#allocation4], 1

</llo_original>
